<compile_context>
chip_gen: v6e
topology: v6e:2x2x1
jax: 0.10.0
libtpu: 0.0.40
codegen_flags: <defaults>
</compile_context>

<pallas_src>
import functools

import jax
import jax.numpy as jnp
from jax.experimental import pallas as pl
from jax.experimental.pallas import tpu as pltpu


def _build_dequant_matrix(C, B):
    """Block-diagonal decode matrix W of shape (C*B, C).

    W[c*B + i, c] = 2**(B-1-i) / 2**B   (exact powers of two -> exact in f32)
    so that  bits @ W = Bit2Num(bits, B) / 2**B.
    """
    weights = (2.0 ** (B - 1 - jnp.arange(B, dtype=jnp.float32))) / (2.0 ** B)  # (B,)
    eye = jnp.eye(C, dtype=jnp.float32)                                          # (C, C)
    W = eye[:, None, :] * weights[None, :, None]                                 # (C, B, C)
    return W.reshape(C * B, C)


def _dequant_kernel(x_ref, w_ref, o_ref, *, half_step):
    # x_ref: (row_tile, C*B) bits (float32 0/1), w_ref: (C*B, C), o_ref: (row_tile, C)
    num = jnp.dot(x_ref[...], w_ref[...], preferred_element_type=jnp.float32)
    o_ref[...] = (num + half_step).astype(o_ref.dtype)


def dequantization_forward(x_bits, B):
    """Pallas forward pass of DequantizationLayer(B).

    x_bits: (batch, C*B) float32 tensor of 0/1 bits.
    returns: (batch, C) float32 dequantized values.
    """
    batch, nbits = x_bits.shape
    assert nbits % B == 0, "bit width must be a multiple of B"
    C = nbits // B

    # Row tile: 8 rows (one full sublane group) per grid step when possible.
    row_tile = 8 if batch % 8 == 0 else batch
    grid = (batch // row_tile,)

    W = _build_dequant_matrix(C, B)
    half_step = float(0.5 / (2.0 ** B))
    kernel = functools.partial(_dequant_kernel, half_step=half_step)

    return pl.pallas_call(
        kernel,
        out_shape=jax.ShapeDtypeStruct((batch, C), jnp.float32),
        grid_spec=pltpu.PrefetchScalarGridSpec(
            num_scalar_prefetch=0,
            grid=grid,
            in_specs=[
                pl.BlockSpec((row_tile, nbits), lambda b: (b, 0)),  # bit rows
                pl.BlockSpec((nbits, C), lambda b: (0, 0)),         # decode matrix
            ],
            out_specs=pl.BlockSpec((row_tile, C), lambda b: (b, 0)),
        ),
        compiler_params=pltpu.CompilerParams(
            dimension_semantics=("parallel",)),
    )(x_bits, W)


# ---------------------- pure-JAX reference (for checking) -------------------
def reference_dequantization(x_bits, B):
    batch, nbits = x_bits.shape
    C = nbits // B
    bits = x_bits.astype(jnp.float32).reshape(batch, C, B)
    weights = 2.0 ** (B - 1 - jnp.arange(B, dtype=jnp.float32))
    num = jnp.sum(bits * weights, axis=-1)
    return (num + 0.5) / (2.0 ** B)


# ------------------------------- setup ---------------------------------------
if __name__ == "__main__":
    B_BITS = 4          # bits per value (module's `B`)
    C = 128             # values per row  (lane-dense output width)
    BATCH = 16          # 2 grid steps of 8 rows -> shards across v7x's 2 TCs

    key = jax.random.PRNGKey(0)
    bits = jax.random.bernoulli(key, 0.5, (BATCH, C * B_BITS)).astype(jnp.float32)

    out = dequantization_forward(bits, B_BITS)
    out = jax.block_until_ready(out)

    ref = reference_dequantization(bits, B_BITS)
    assert out.shape == (BATCH, C)
    assert jnp.allclose(out, ref, rtol=1e-6, atol=1e-6), "mismatch vs reference"
    print("KERNEL_OK")
</pallas_src>

<mosaic_0001>
module attributes {stable_mosaic.version = 11 : i64} {
  func.func @_dequant_kernel(%arg0: i32, %arg1: memref<8x512xf32, #tpu.memory_space<vmem>>, %arg2: memref<512x128xf32, #tpu.memory_space<vmem>>, %arg3: memref<8x128xf32, #tpu.memory_space<vmem>>) attributes {dimension_semantics = [#tpu.dimension_semantics<parallel>], iteration_bounds = array<i64: 2>, scalar_prefetch = 0 : i64, scratch_operands = 0 : i64, tpu.core_type = #tpu.core_type<tc>, window_params = [{transform_indices = @transform_0, window_bounds = array<i64: 8, 512>}, {pipeline_mode = #tpu.pipeline_mode<synchronous>, transform_indices = @transform_1, window_bounds = array<i64: 512, 128>}, {transform_indices = @transform_2, window_bounds = array<i64: 8, 128>}]} {
    %c0 = arith.constant 0 : index
    %c0_0 = arith.constant 0 : index
    %0 = vector.load %arg1[%c0, %c0_0] : memref<8x512xf32, #tpu.memory_space<vmem>>, vector<8x512xf32>
    %c0_1 = arith.constant 0 : index
    %c0_2 = arith.constant 0 : index
    %1 = vector.load %arg2[%c0_1, %c0_2] : memref<512x128xf32, #tpu.memory_space<vmem>>, vector<512x128xf32>
    %cst = arith.constant dense<0.000000e+00> : vector<8x128xf32>
    %2 = tpu.matmul %0, %1, %cst {dimension_numbers = #tpu.dot_dimension_numbers<[1], [0], [0], [1], [0, 0, 1, 1], [], []>} : vector<8x512xf32>, vector<512x128xf32>, vector<8x128xf32> -> vector<8x128xf32>
    %cst_3 = arith.constant 3.125000e-02 : f32
    %3 = vector.broadcast %cst_3 : f32 to vector<8x128xf32>
    %4 = arith.addf %2, %3 : vector<8x128xf32>
    %c0_4 = arith.constant 0 : index
    %c0_5 = arith.constant 0 : index
    %5 = vector.load %arg3[%c0_4, %c0_5] : memref<8x128xf32, #tpu.memory_space<vmem>>, vector<8x128xf32>
    tpu.vector_store %arg3[%c0_4, %c0_5], %4 {strides = array<i32>} : memref<8x128xf32, #tpu.memory_space<vmem>>, vector<8x128xf32>,
    return
  }
  func.func @transform_0(%arg0: i32) -> (i32, i32) {
    %c0_i32 = arith.constant 0 : i32
    %c0_i32_0 = arith.constant 0 : i32
    return %arg0, %c0_i32 : i32, i32
  }
  func.func @transform_1(%arg0: i32) -> (i32, i32) {
    %c0_i32 = arith.constant 0 : i32
    %c0_i32_0 = arith.constant 0 : i32
    %c0_i32_1 = arith.constant 0 : i32
    return %c0_i32, %c0_i32_0 : i32, i32
  }
  func.func @transform_2(%arg0: i32) -> (i32, i32) {
    %c0_i32 = arith.constant 0 : i32
    %c0_i32_0 = arith.constant 0 : i32
    return %arg0, %c0_i32 : i32, i32
  }
}

</mosaic_0001>

<llo_original>
// kernel: tpu_custom_call.1
$region0: #{tpu_custom_call.1}
  #allocation0 [shape = 'u32[]', space=smem, size = 0x4, offset = 0x4, fixed_abs, tag = 'smem constant byte address 0x4 - core index']
  #allocation1 [shape = 'u32[144,128]{1,0:T(1,128)}', space=vmem, size = 0x12000, scoped, tag = 'internal scratch']
  %s0 = inlined_call_operand.hbm [shape: f32[16,512], index: 0, kind: input, shape index: {}]
  %s1 = inlined_call_operand.hbm [shape: f32[512,128], index: 1, kind: input, shape index: {}]
  %s2 = inlined_call_operand.hbm [shape: f32[16,128], index: 2, kind: output, shape index: {}]
  %s3 = sld [smem:[#allocation0]]
  $region49: #{tpu_custom_call.1} parent=0
    _
  %s5 = ssub.s32 1, %s3
  %s6 = scalar_select 0, %s5, %s3
  $region1: #{tpu_custom_call.1} parent=0
    #allocation2 [shape = 'u8[32768]{0}', space=vmem, size = 0x8000, scoped, tag = 'input window, operand 0']
    #allocation3 [shape = 's32[2]{0}', space=sflag, size = 0x8, scoped, tag = 'scoped memory for tpu_custom_call.1']
    #allocation4 [shape = 's32[2]{0}', space=sflag, size = 0x8, scoped, tag = 'scoped memory for tpu_custom_call.1']
    #allocation5 [shape = 'u8[262144]{0}', space=vmem, size = 0x40000, scoped, tag = 'input window, operand 1, single buffered']
    #allocation6 [shape = 's32[1]{0}', space=sflag, size = 0x4, scoped, tag = 'scoped memory for tpu_custom_call.1']
    #allocation7 [shape = 'u8[8192]{0}', space=vmem, size = 0x2000, scoped, tag = 'output window, operand 0']
    %7 = vsyncpa [#allocation3], 0
    %s8 = scalar_lea.sflag [#allocation3], 1
    %9 = vsyncpa %s8, 0
    %10 = vsyncpa [#allocation6], 0
    %11 = vsyncpa [#allocation4], 0
    %s12 = scalar_lea.sflag [#allocation4], 1
    %13 = vsyncpa %s12, 0
    loop: start=0, step=1, limit=4
    $region2: #{tpu_custom_call.1} parent=1 // loop_pre_header
      _
    $region3: #{tpu_custom_call.1} parent=1 // loop_header
      %s15 = sphi 0, %s19
      %p16 = scmp.ge.s32.totalorder %s15, 4
      %s25 = sphi 0, %s27
      %s28 = sphi 0, %s25
      %s29 = sphi 0, %s28
      %s45 = sphi 0, %s29
      %s49 = sphi 0, %s49
      %s51 = sphi 0, %s49
      %s52 = sphi 0, %s51
      %s66 = sphi 0, %s52
      %s72 = sphi 0, %s74
      %s75 = sphi 0, %s72
      %s76 = sphi 0, %s75
      %s92 = sphi 0, %s76
    $region4: #{tpu_custom_call.1} parent=1 // loop_header_branch
      %18 = sbr.rel (%p16) target = $region8
    $region5: #{tpu_custom_call.1} parent=1 // loop_body
      %s20 = ssub.s32 %s15, 1
      %s21 = ssub.s32 %s15, 2
      %s22 = sadd.s32 %s15, 1
      %s23 = ssub.s32 %s15, %s22
      %p24 = scmp.eq.s32.totalorder %s23, 0
      %s26 = sadd.s32 %s25, 1
      %s27 = scalar_select %p24, %s25, %s26
      %p30 = pneg %p24
      %p31 = scmp.eq.s32.totalorder %s15, 1
      %p32 = por %p30, %p31
      %p33 = scmp.ne.s32.totalorder %s25, %s28
      %p34 = scmp.eq.s32.totalorder %s15, 0
      %p35 = por %p33, %p34
      %p36 = scmp.ne.s32.totalorder %s25, %s28
      %p37 = scmp.eq.s32.totalorder %s20, 1
      %p38 = por %p36, %p37
      %p39 = scmp.ne.s32.totalorder %s28, %s29
      %p40 = scmp.eq.s32.totalorder %s20, 0
      %p41 = por %p39, %p40
      %p42 = scmp.ne.s32.totalorder %s28, %s29
      %p43 = scmp.eq.s32.totalorder %s21, 1
      %p44 = por %p42, %p43
      %p46 = scmp.ne.s32.totalorder %s29, %s45
      %p47 = scmp.eq.s32.totalorder %s21, 0
      %p48 = por %p46, %p47
      %s50 = sadd.s32 %s49, 1
      %p53 = scmp.eq.s32.totalorder %s15, 1
      %p54 = scmp.ne.s32.totalorder %s49, %s51
      %p55 = scmp.eq.s32.totalorder %s15, 0
      %p56 = por %p54, %p55
      %p57 = scmp.ne.s32.totalorder %s49, %s51
      %p58 = scmp.eq.s32.totalorder %s20, 1
      %p59 = por %p57, %p58
      %p60 = scmp.ne.s32.totalorder %s51, %s52
      %p61 = scmp.eq.s32.totalorder %s20, 0
      %p62 = por %p60, %p61
      %p63 = scmp.ne.s32.totalorder %s51, %s52
      %p64 = scmp.eq.s32.totalorder %s21, 1
      %p65 = por %p63, %p64
      %p67 = scmp.ne.s32.totalorder %s52, %s66
      %p68 = scmp.eq.s32.totalorder %s21, 0
      %p69 = por %p67, %p68
      %s70 = ssub.s32 %s15, %s22
      %p71 = scmp.eq.s32.totalorder %s70, 0
      %s73 = sadd.s32 %s72, 1
      %s74 = scalar_select %p71, %s72, %s73
      %p77 = pneg %p71
      %p78 = scmp.eq.s32.totalorder %s15, 1
      %p79 = por %p77, %p78
      %p80 = scmp.ne.s32.totalorder %s72, %s75
      %p81 = scmp.eq.s32.totalorder %s15, 0
      %p82 = por %p80, %p81
      %p83 = scmp.ne.s32.totalorder %s72, %s75
      %p84 = scmp.eq.s32.totalorder %s20, 1
      %p85 = por %p83, %p84
      %p86 = scmp.ne.s32.totalorder %s75, %s76
      %p87 = scmp.eq.s32.totalorder %s20, 0
      %p88 = por %p86, %p87
      %p89 = scmp.ne.s32.totalorder %s75, %s76
      %p90 = scmp.eq.s32.totalorder %s21, 1
      %p91 = por %p89, %p90
      %p93 = scmp.ne.s32.totalorder %s76, %s92
      %p94 = scmp.eq.s32.totalorder %s21, 0
      %p95 = por %p93, %p94
      %p96 = scmp.le.s32.totalorder 1, %s15
      %p97 = scmp.lt.s32.totalorder %s15, 3
      %p98 = pnand %p96, %p97
      %p99 = pneg %p98
      // Predicated region
      $region9: #{tpu_custom_call.1} parent=5 // pred_check
        _
      $region10: #{tpu_custom_call.1} parent=5 // pred_check_branch
        %101 = sbr.rel (%p98) target = $region12
      $region11: #{tpu_custom_call.1} parent=5 // pred_region
        %s102 = ssub.s32 %s15, 1
        // Predicated region
        $region13: #{tpu_custom_call.1} parent=11 // pred_check
          %p103 = pneg %p62
        $region14: #{tpu_custom_call.1} parent=11 // pred_check_branch
          %105 = sbr.rel (%p103) target = $region16
        $region15: #{tpu_custom_call.1} parent=11 // pred_region
          %s107 = ssub.s32 8192, 8192
          %108 = vsyncadd [#allocation6], %s107
          %s109 = sshll.u32 [#allocation5], 4
          %s110 = int_to_ptr.vmem [resolvable:$true] %s109
          %115 = dma.hbm_to_vmem [thread:$0]  %s1, 8192, %s110, [#allocation6], 128, 128, 8
        $region16: #{tpu_custom_call.1} parent=11 // pred_fallthru
          _
      $region12: #{tpu_custom_call.1} parent=5 // pred_fallthru
        _
      %p116 = scmp.lt.s32.totalorder %s15, 2
      // Predicated region
      $region17: #{tpu_custom_call.1} parent=5 // pred_check
        %p117 = pneg %p116
      $region18: #{tpu_custom_call.1} parent=5 // pred_check_branch
        %119 = sbr.rel (%p117) target = $region20
      $region19: #{tpu_custom_call.1} parent=5 // pred_region
        // Predicated region
        $region21: #{tpu_custom_call.1} parent=19 // pred_check
          %p120 = pneg %p35
        $region22: #{tpu_custom_call.1} parent=19 // pred_check_branch
          %122 = sbr.rel (%p120) target = $region24
        $region23: #{tpu_custom_call.1} parent=19 // pred_region
          %s123 = sand.u32 %s25, 1
          %s124 = scalar_lea.sflag [#allocation3], %s123
          %s125 = sand.u32 %s25, 1
          %s126 = smul.addr %s125, 32
          %s127 = scalar_lea.vmem [#allocation2], %s126
          %s129 = ssub.s32 512, 512
          %130 = vsyncadd %s124, %s129
          %s131 = smul.addr %s15, 4
          %s132 = smul.addr %s131, 128
          %s133 = scalar_lea.hbm %s0, %s132
          %s135 = sshll.u32 %s127, 4
          %s136 = int_to_ptr.vmem [resolvable:$true] %s135
          %138 = dma.hbm_to_vmem [thread:$0]  %s133, 512, %s136, %s124
        $region24: #{tpu_custom_call.1} parent=19 // pred_fallthru
          _
      $region20: #{tpu_custom_call.1} parent=5 // pred_fallthru
        _
      %p139 = scmp.le.s32.totalorder 1, %s15
      %p140 = scmp.lt.s32.totalorder %s15, 3
      %p141 = pnand %p139, %p140
      %p142 = pneg %p141
      // Predicated region
      $region25: #{tpu_custom_call.1} parent=5 // pred_check
        _
      $region26: #{tpu_custom_call.1} parent=5 // pred_check_branch
        %144 = sbr.rel (%p141) target = $region28
      $region27: #{tpu_custom_call.1} parent=5 // pred_region
        %s145 = ssub.s32 %s15, 1
        %s146 = sand.u32 %s28, 1
        %s147 = scalar_lea.sflag [#allocation3], %s146
        %s148 = sand.u32 %s28, 1
        %s149 = smul.addr %s148, 32
        %s150 = scalar_lea.vmem [#allocation2], %s149
        // Predicated region
        $region29: #{tpu_custom_call.1} parent=27 // pred_check
          %p151 = pneg %p41
        $region30: #{tpu_custom_call.1} parent=27 // pred_check_branch
          %153 = sbr.rel (%p151) target = $region32
        $region31: #{tpu_custom_call.1} parent=27 // pred_region
          %154 = dma.done %s147, 512
        $region32: #{tpu_custom_call.1} parent=27 // pred_fallthru
          _
        // Predicated region
        $region33: #{tpu_custom_call.1} parent=27 // pred_check
          %p155 = pneg %p62
        $region34: #{tpu_custom_call.1} parent=27 // pred_check_branch
          %157 = sbr.rel (%p155) target = $region36
        $region35: #{tpu_custom_call.1} parent=27 // pred_region
          %158 = dma.done [#allocation6], 8192
        $region36: #{tpu_custom_call.1} parent=27 // pred_fallthru
          _
        %s159 = sand.u32 %s28, 1
        %s160 = scalar_lea.sflag [#allocation3], %s159
        %s161 = sand.u32 %s28, 1
        %s162 = smul.addr %s161, 32
        %s163 = scalar_lea.vmem [#allocation2], %s162
        %p164 = pneg %p41
        %p165 = pneg %p38
        %p166 = pneg %p62
        %p167 = pneg %p59
        %p168 = pneg %p88
        %p169 = pneg %p85
        %s170 = sand.u32 %s75, 1
        %s171 = scalar_lea.sflag [#allocation4], %s170
        %s172 = sand.u32 %s75, 1
        %s173 = smul.addr %s172, 8
        %s174 = scalar_lea.vmem [#allocation7], %s173
        %v175 = vld [vmem:[%s150] sm:$0xff]
        %v176 = vld [vmem:[%s150 + $0x8] sm:$0xff]
        %v177 = vld [vmem:[%s150 + $0x10] sm:$0xff]
        %v178 = vld [vmem:[%s150 + $0x18] sm:$0xff]
        %v179 = vld [vmem:[#allocation5] sm:$0xff]
        %v180 = vld [vmem:[#allocation5 + $0x8] sm:$0xff]
        %v181 = vld [vmem:[#allocation5 + $0x10] sm:$0xff]
        %v182 = vld [vmem:[#allocation5 + $0x18] sm:$0xff]
        %v183 = vld [vmem:[#allocation5 + $0x20] sm:$0xff]
        %v184 = vld [vmem:[#allocation5 + $0x28] sm:$0xff]
        %v185 = vld [vmem:[#allocation5 + $0x30] sm:$0xff]
        %v186 = vld [vmem:[#allocation5 + $0x38] sm:$0xff]
        %v187 = vld [vmem:[#allocation5 + $0x40] sm:$0xff]
        %v188 = vld [vmem:[#allocation5 + $0x48] sm:$0xff]
        %v189 = vld [vmem:[#allocation5 + $0x50] sm:$0xff]
        %v190 = vld [vmem:[#allocation5 + $0x58] sm:$0xff]
        %v191 = vld [vmem:[#allocation5 + $0x60] sm:$0xff]
        %v192 = vld [vmem:[#allocation5 + $0x68] sm:$0xff]
        %v193 = vld [vmem:[#allocation5 + $0x70] sm:$0xff]
        %v194 = vld [vmem:[#allocation5 + $0x78] sm:$0xff]
        %v195 = vld [vmem:[#allocation5 + $0x80] sm:$0xff]
        %v196 = vld [vmem:[#allocation5 + $0x88] sm:$0xff]
        %v197 = vld [vmem:[#allocation5 + $0x90] sm:$0xff]
        %v198 = vld [vmem:[#allocation5 + $0x98] sm:$0xff]
        %v199 = vld [vmem:[#allocation5 + $0xa0] sm:$0xff]
        %v200 = vld [vmem:[#allocation5 + $0xa8] sm:$0xff]
        %v201 = vld [vmem:[#allocation5 + $0xb0] sm:$0xff]
        %v202 = vld [vmem:[#allocation5 + $0xb8] sm:$0xff]
        %v203 = vld [vmem:[#allocation5 + $0xc0] sm:$0xff]
        %v204 = vld [vmem:[#allocation5 + $0xc8] sm:$0xff]
        %v205 = vld [vmem:[#allocation5 + $0xd0] sm:$0xff]
        %v206 = vld [vmem:[#allocation5 + $0xd8] sm:$0xff]
        %v207 = vld [vmem:[#allocation5 + $0xe0] sm:$0xff]
        %v208 = vld [vmem:[#allocation5 + $0xe8] sm:$0xff]
        %v209 = vld [vmem:[#allocation5 + $0xf0] sm:$0xff]
        %v210 = vld [vmem:[#allocation5 + $0xf8] sm:$0xff]
        %v211 = vld [vmem:[#allocation5 + $0x100] sm:$0xff]
        %v212 = vld [vmem:[#allocation5 + $0x108] sm:$0xff]
        %v213 = vld [vmem:[#allocation5 + $0x110] sm:$0xff]
        %v214 = vld [vmem:[#allocation5 + $0x118] sm:$0xff]
        %v215 = vld [vmem:[#allocation5 + $0x120] sm:$0xff]
        %v216 = vld [vmem:[#allocation5 + $0x128] sm:$0xff]
        %v217 = vld [vmem:[#allocation5 + $0x130] sm:$0xff]
        %v218 = vld [vmem:[#allocation5 + $0x138] sm:$0xff]
        %v219 = vld [vmem:[#allocation5 + $0x140] sm:$0xff]
        %v220 = vld [vmem:[#allocation5 + $0x148] sm:$0xff]
        %v221 = vld [vmem:[#allocation5 + $0x150] sm:$0xff]
        %v222 = vld [vmem:[#allocation5 + $0x158] sm:$0xff]
        %v223 = vld [vmem:[#allocation5 + $0x160] sm:$0xff]
        %v224 = vld [vmem:[#allocation5 + $0x168] sm:$0xff]
        %v225 = vld [vmem:[#allocation5 + $0x170] sm:$0xff]
        %v226 = vld [vmem:[#allocation5 + $0x178] sm:$0xff]
        %v227 = vld [vmem:[#allocation5 + $0x180] sm:$0xff]
        %v228 = vld [vmem:[#allocation5 + $0x188] sm:$0xff]
        %v229 = vld [vmem:[#allocation5 + $0x190] sm:$0xff]
        %v230 = vld [vmem:[#allocation5 + $0x198] sm:$0xff]
        %v231 = vld [vmem:[#allocation5 + $0x1a0] sm:$0xff]
        %v232 = vld [vmem:[#allocation5 + $0x1a8] sm:$0xff]
        %v233 = vld [vmem:[#allocation5 + $0x1b0] sm:$0xff]
        %v234 = vld [vmem:[#allocation5 + $0x1b8] sm:$0xff]
        %v235 = vld [vmem:[#allocation5 + $0x1c0] sm:$0xff]
        %v236 = vld [vmem:[#allocation5 + $0x1c8] sm:$0xff]
        %v237 = vld [vmem:[#allocation5 + $0x1d0] sm:$0xff]
        %v238 = vld [vmem:[#allocation5 + $0x1d8] sm:$0xff]
        %v239 = vld [vmem:[#allocation5 + $0x1e0] sm:$0xff]
        %v240 = vld [vmem:[#allocation5 + $0x1e8] sm:$0xff]
        %v241 = vld [vmem:[#allocation5 + $0x1f0] sm:$0xff]
        %v242 = vld [vmem:[#allocation5 + $0x1f8] sm:$0xff]
        %243 = vmatprep.subr.mxu0 0.0
        %244 = vmatpush1.msra.mxu0 %v194
        %245 = vmatprep.subr.mxu0 0.0
        %246 = vmatpush1.msra.mxu0 %v193
        %247 = vmatprep.subr.mxu0 0.0
        %248 = vmatpush1.msra.mxu0 %v192
        %249 = vmatprep.subr.mxu0 0.0
        %250 = vmatpush1.msra.mxu0 %v191
        %251 = vmatprep.subr.mxu0 0.0
        %252 = vmatpush1.msra.mxu0 %v190
        %253 = vmatprep.subr.mxu0 0.0
        %254 = vmatpush1.msra.mxu0 %v189
        %255 = vmatprep.subr.mxu0 0.0
        %256 = vmatpush1.msra.mxu0 %v188
        %257 = vmatprep.subr.mxu0 0.0
        %258 = vmatpush1.msra.mxu0 %v187
        %259 = vmatprep.subr.mxu0 0.0
        %260 = vmatpush1.msra.mxu0 %v186
        %261 = vmatprep.subr.mxu0 0.0
        %262 = vmatpush1.msra.mxu0 %v185
        %263 = vmatprep.subr.mxu0 0.0
        %264 = vmatpush1.msra.mxu0 %v184
        %265 = vmatprep.subr.mxu0 0.0
        %266 = vmatpush1.msra.mxu0 %v183
        %267 = vmatprep.subr.mxu0 0.0
        %268 = vmatpush1.msra.mxu0 %v182
        %269 = vmatprep.subr.mxu0 0.0
        %270 = vmatpush1.msra.mxu0 %v181
        %271 = vmatprep.subr.mxu0 0.0
        %272 = vmatpush1.msra.mxu0 %v180
        %273 = vmatprep.subr.mxu0 0.0
        %274 = vmatpush1.msra.mxu0 %v179
        %275 = vmatprep.subr.mxu0 0.0
        %276 = vmatpush2.msra.mxu0 %v210
        %277 = vmatprep.subr.mxu0 0.0
        %278 = vmatpush2.msra.mxu0 %v209
        %279 = vmatprep.subr.mxu0 0.0
        %280 = vmatpush2.msra.mxu0 %v208
        %281 = vmatprep.subr.mxu0 0.0
        %282 = vmatpush2.msra.mxu0 %v207
        %283 = vmatprep.subr.mxu0 0.0
        %284 = vmatpush2.msra.mxu0 %v206
        %285 = vmatprep.subr.mxu0 0.0
        %286 = vmatpush2.msra.mxu0 %v205
        %287 = vmatprep.subr.mxu0 0.0
        %288 = vmatpush2.msra.mxu0 %v204
        %289 = vmatprep.subr.mxu0 0.0
        %290 = vmatpush2.msra.mxu0 %v203
        %291 = vmatprep.subr.mxu0 0.0
        %292 = vmatpush2.msra.mxu0 %v202
        %293 = vmatprep.subr.mxu0 0.0
        %294 = vmatpush2.msra.mxu0 %v201
        %295 = vmatprep.subr.mxu0 0.0
        %296 = vmatpush2.msra.mxu0 %v200
        %297 = vmatprep.subr.mxu0 0.0
        %298 = vmatpush2.msra.mxu0 %v199
        %299 = vmatprep.subr.mxu0 0.0
        %300 = vmatpush2.msra.mxu0 %v198
        %301 = vmatprep.subr.mxu0 0.0
        %302 = vmatpush2.msra.mxu0 %v197
        %303 = vmatprep.subr.mxu0 0.0
        %304 = vmatpush2.msra.mxu0 %v196
        %305 = vmatprep.subr.mxu0 0.0
        %306 = vmatpush2.msra.mxu0 %v195
        %307 = vmatprep.mubr.f32.mxu0 %v176
        %308 = vmatmul.mubr.f32.gmra.mxu0 %v175
        %v309 = vpop.f32.mrf.mxu0
        %v310 = vadd.f32 0.03125, %v309
        %v311 = vpop.f32.mrf.mxu0
        %312 = vdwg.mxu0
        %313 = vmatprep.subr.mxu0 0.0
        %314 = vmatpush1.msra.mxu0 %v226
        %315 = vmatprep.subr.mxu0 0.0
        %316 = vmatpush1.msra.mxu0 %v225
        %317 = vmatprep.subr.mxu0 0.0
        %318 = vmatpush1.msra.mxu0 %v224
        %319 = vmatprep.subr.mxu0 0.0
        %320 = vmatpush1.msra.mxu0 %v223
        %321 = vmatprep.subr.mxu0 0.0
        %322 = vmatpush1.msra.mxu0 %v222
        %323 = vmatprep.subr.mxu0 0.0
        %324 = vmatpush1.msra.mxu0 %v221
        %325 = vmatprep.subr.mxu0 0.0
        %326 = vmatpush1.msra.mxu0 %v220
        %327 = vmatprep.subr.mxu0 0.0
        %328 = vmatpush1.msra.mxu0 %v219
        %329 = vmatprep.subr.mxu0 0.0
        %330 = vmatpush1.msra.mxu0 %v218
        %331 = vmatprep.subr.mxu0 0.0
        %332 = vmatpush1.msra.mxu0 %v217
        %333 = vmatprep.subr.mxu0 0.0
        %334 = vmatpush1.msra.mxu0 %v216
        %335 = vmatprep.subr.mxu0 0.0
        %336 = vmatpush1.msra.mxu0 %v215
        %337 = vmatprep.subr.mxu0 0.0
        %338 = vmatpush1.msra.mxu0 %v214
        %339 = vmatprep.subr.mxu0 0.0
        %340 = vmatpush1.msra.mxu0 %v213
        %341 = vmatprep.subr.mxu0 0.0
        %342 = vmatpush1.msra.mxu0 %v212
        %343 = vmatprep.subr.mxu0 0.0
        %344 = vmatpush1.msra.mxu0 %v211
        %345 = vmatprep.subr.mxu0 0.0
        %346 = vmatpush2.msra.mxu0 %v242
        %347 = vmatprep.subr.mxu0 0.0
        %348 = vmatpush2.msra.mxu0 %v241
        %349 = vmatprep.subr.mxu0 0.0
        %350 = vmatpush2.msra.mxu0 %v240
        %351 = vmatprep.subr.mxu0 0.0
        %352 = vmatpush2.msra.mxu0 %v239
        %353 = vmatprep.subr.mxu0 0.0
        %354 = vmatpush2.msra.mxu0 %v238
        %355 = vmatprep.subr.mxu0 0.0
        %356 = vmatpush2.msra.mxu0 %v237
        %357 = vmatprep.subr.mxu0 0.0
        %358 = vmatpush2.msra.mxu0 %v236
        %359 = vmatprep.subr.mxu0 0.0
        %360 = vmatpush2.msra.mxu0 %v235
        %361 = vmatprep.subr.mxu0 0.0
        %362 = vmatpush2.msra.mxu0 %v234
        %363 = vmatprep.subr.mxu0 0.0
        %364 = vmatpush2.msra.mxu0 %v233
        %365 = vmatprep.subr.mxu0 0.0
        %366 = vmatpush2.msra.mxu0 %v232
        %367 = vmatprep.subr.mxu0 0.0
        %368 = vmatpush2.msra.mxu0 %v231
        %369 = vmatprep.subr.mxu0 0.0
        %370 = vmatpush2.msra.mxu0 %v230
        %371 = vmatprep.subr.mxu0 0.0
        %372 = vmatpush2.msra.mxu0 %v229
        %373 = vmatprep.subr.mxu0 0.0
        %374 = vmatpush2.msra.mxu0 %v228
        %375 = vmatprep.subr.mxu0 0.0
        %376 = vmatpush2.msra.mxu0 %v227
        %377 = vmatprep.mubr.f32.mxu0 %v178
        %378 = vmatmul.mubr.f32.gmra.mxu0 %v177
        %v379 = vpop.f32.mrf.mxu0
        %v380 = vadd.f32 %v310, %v379
        %v381 = vpop.f32.mrf.mxu0
        %382 = vdwg.mxu0
        %383 = vst [vmem:[%s174] sm:$0xff] %v380
        %s384 = sand.u32 %s75, 1
        %s385 = scalar_lea.sflag [#allocation4], %s384
        %s386 = sand.u32 %s75, 1
        %s387 = smul.addr %s386, 8
        %s388 = scalar_lea.vmem [#allocation7], %s387
        // Predicated region
        $region37: #{tpu_custom_call.1} parent=27 // pred_check
          %p389 = pneg %p85
        $region38: #{tpu_custom_call.1} parent=27 // pred_check_branch
          %391 = sbr.rel (%p389) target = $region40
        $region39: #{tpu_custom_call.1} parent=27 // pred_region
          %s393 = ssub.s32 128, 128
          %394 = vsyncadd %s385, %s393
          %s395 = smul.addr %s20, 128
          %s396 = scalar_lea.hbm %s2, %s395
          %s398 = sshll.u32 %s388, 4
          %s399 = int_to_ptr.vmem [resolvable:$true] %s398
          %401 = dma.vmem_to_hbm [thread:$0]  %s399, 128, %s396, %s385
        $region40: #{tpu_custom_call.1} parent=27 // pred_fallthru
          _
      $region28: #{tpu_custom_call.1} parent=5 // pred_fallthru
        _
      %p402 = scmp.le.s32.totalorder 2, %s15
      // Predicated region
      $region41: #{tpu_custom_call.1} parent=5 // pred_check
        %p403 = pneg %p402
      $region42: #{tpu_custom_call.1} parent=5 // pred_check_branch
        %405 = sbr.rel (%p403) target = $region44
      $region43: #{tpu_custom_call.1} parent=5 // pred_region
        %s406 = ssub.s32 %s15, 2
        // Predicated region
        $region45: #{tpu_custom_call.1} parent=43 // pred_check
          %p407 = pneg %p91
        $region46: #{tpu_custom_call.1} parent=43 // pred_check_branch
          %409 = sbr.rel (%p407) target = $region48
        $region47: #{tpu_custom_call.1} parent=43 // pred_region
          %s410 = sand.u32 %s76, 1
          %s411 = scalar_lea.sflag [#allocation4], %s410
          %s412 = sand.u32 %s76, 1
          %s413 = smul.addr %s412, 8
          %s414 = scalar_lea.vmem [#allocation7], %s413
          %415 = dma.done %s411, 128
        $region48: #{tpu_custom_call.1} parent=43 // pred_fallthru
          _
      $region44: #{tpu_custom_call.1} parent=5 // pred_fallthru
        _
    $region6: #{tpu_custom_call.1} parent=1 // loop_footer
      %s19 = sadd.s32 1, %s15
    $region7: #{tpu_custom_call.1} parent=1 // loop_footer_branch
      %14 = sbr.rel target = $region3
    $region8: #{tpu_custom_call.1} parent=1 // loop_exit
      _
    %416 = vsyncpa [#allocation3], 1
    %s417 = scalar_lea.sflag [#allocation3], 1
    %418 = vsyncpa %s417, 1
    %419 = vsyncpa [#allocation6], 1
    %420 = vsyncpa [#allocation4], 1
    %s421 = scalar_lea.sflag [#allocation4], 1
    %422 = vsyncpa %s421, 1

</llo_original>
